<compile_context>
chip_gen: v6e
topology: v6e:2x2x1
jax: 0.10.0
libtpu: 0.0.40
codegen_flags: <defaults>
</compile_context>

<pallas_src>
import functools

import jax
import jax.numpy as jnp
from jax.experimental import pallas as pl
from jax.experimental.pallas import tpu as pltpu


def ngram_rnn_kernel(xproj_ref, whh_t_ref, wlin_t_ref, blin_ref, out_ref,
                     hs_ref, *, proj_dtype=jnp.float32):
    # xproj_ref : (T, TILE_B, H)  gathered x_t @ W_ih^T + (b_ih + b_hh), time-major
    # whh_t_ref : (H, H)          W_hh^T
    # wlin_t_ref: (H, Vp)         W_lin^T, lane-padded to Vp (multiple of 128)
    # blin_ref  : (1, Vp)         b_lin, lane-padded
    # out_ref   : (TILE_B, T, Vp) batch-major output block
    # hs_ref    : (T*TILE_B, H)   VMEM scratch slab of hidden states (row t*TILE_B + b)
    T, TB, H = xproj_ref.shape

    whh_t = whh_t_ref[...]  # hoisted: loaded once, reused across all T steps

    # Serial recurrence, fully unrolled (T is a small static trip count).
    # h_0 = relu(x_0 @ W_ih^T + b) since the initial hidden state is zero.
    # Each step's hidden state goes straight to the VMEM scratch slab so only
    # the current h stays live in vregs.
    h = jnp.maximum(xproj_ref[0], 0.0)
    hs_ref[pl.ds(0, TB), :] = h
    for t in range(1, T):
        pre = xproj_ref[t] + jnp.dot(h, whh_t,
                                     preferred_element_type=jnp.float32)
        h = jnp.maximum(pre, 0.0)
        hs_ref[pl.ds(t * TB, TB), :] = h

    # Output projection hoisted out of the loop: one (T*TB, H) @ (H, Vp) MXU
    # matmul from the scratch slab.  Operands optionally bf16 (native MXU rate
    # at real vocab sizes); accumulation stays f32.
    proj = jnp.dot(hs_ref[...].astype(proj_dtype),
                   wlin_t_ref[...].astype(proj_dtype),
                   preferred_element_type=jnp.float32) + blin_ref[...]

    # Lane-dense (Vp-wide) per-t stores into the batch-major output block:
    # out[b, t, :] = proj[t*TB + b, :].  No wrapper-side transpose needed.
    for t in range(T):
        out_ref[:, t, :] = proj[t * TB:(t + 1) * TB, :].astype(out_ref.dtype)


def ngram_rnn_forward(inputs, emb_w, w_ih, w_hh, b_ih, b_hh, w_lin, b_lin,
                      *, tile_b=8, proj_dtype=jnp.float32):
    """inputs: (B, T) int32 token ids. Returns (B, T, V) float32."""
    B, T = inputs.shape
    V = emb_w.shape[0]
    H = w_ih.shape[0]

    assert tile_b % 8 == 0, "batch tile must be a sublane multiple"
    Bp = ((B + tile_b - 1) // tile_b) * tile_b   # pad batch to tile multiple
    Vp = ((V + 127) // 128) * 128                # pad vocab (output lanes) to 128

    # Fold embedding + input projection + both RNN biases into one (V, H)
    # table, then gather it time-major (only the tiny int32 id array is
    # transposed, never a float tensor).
    xproj_table = emb_w @ w_ih.T + (b_ih + b_hh)             # (V, H)
    xproj_tbh = jnp.take(xproj_table, inputs.T, axis=0)      # (T, B, H)
    if Bp != B:
        xproj_tbh = jnp.pad(xproj_tbh, ((0, 0), (0, Bp - B), (0, 0)))

    whh_t = w_hh.T                                           # (H, H)
    wlin_t = jnp.pad(w_lin.T, ((0, 0), (0, Vp - V)))         # (H, Vp)
    blin = jnp.pad(b_lin, (0, Vp - V)).reshape(1, Vp)        # (1, Vp)

    kernel = functools.partial(ngram_rnn_kernel, proj_dtype=proj_dtype)

    out = pl.pallas_call(
        kernel,
        out_shape=jax.ShapeDtypeStruct((Bp, T, Vp), jnp.float32),
        grid_spec=pltpu.PrefetchScalarGridSpec(
            num_scalar_prefetch=0,
            grid=(Bp // tile_b,),   # batch-parallel grid axis
            in_specs=[
                pl.BlockSpec((T, tile_b, H), lambda b: (0, b, 0)),   # xproj tile
                pl.BlockSpec((H, H), lambda b: (0, 0)),              # W_hh^T
                pl.BlockSpec((H, Vp), lambda b: (0, 0)),             # W_lin^T
                pl.BlockSpec((1, Vp), lambda b: (0, 0)),             # b_lin
            ],
            out_specs=pl.BlockSpec((tile_b, T, Vp), lambda b: (b, 0, 0)),
            scratch_shapes=[pltpu.VMEM((T * tile_b, H), jnp.float32)],
        ),
        compiler_params=pltpu.CompilerParams(
            dimension_semantics=("parallel",)),
    )(xproj_tbh, whh_t, wlin_t, blin)

    # Output is already batch-major; just strip the padding.
    return out[:B, :, :V]


def ngram_rnn_reference(inputs, emb_w, w_ih, w_hh, b_ih, b_hh, w_lin, b_lin):
    """Pure-JAX reference mirroring torch semantics (relu RNN, batch_first)."""
    embed = jnp.take(emb_w, inputs, axis=0)                  # (B, T, V)
    B, T, V = embed.shape
    H = w_ih.shape[0]
    h0 = jnp.zeros((B, H), jnp.float32)

    def scan_fn(h, x_t):
        h_new = jax.nn.relu(x_t @ w_ih.T + b_ih + h @ w_hh.T + b_hh)
        return h_new, h_new

    _, hs = jax.lax.scan(scan_fn, h0, jnp.transpose(embed, (1, 0, 2)))
    hs = jnp.transpose(hs, (1, 0, 2))                        # (B, T, H)
    return hs @ w_lin.T + b_lin


if __name__ == "__main__":
    # Small, deterministic configuration.
    vocab_size = 16    # V  (embedding_dim == vocab_size in the module)
    output_dim = 32    # H  (RNN hidden size)
    B, T = 2, 8

    key = jax.random.PRNGKey(0)
    ks = jax.random.split(key, 8)

    inputs = jax.random.randint(ks[0], (B, T), 0, vocab_size, dtype=jnp.int32)

    # Parameters (deterministic init; shapes follow nn.Embedding/nn.RNN/nn.Linear).
    emb_w = jax.random.normal(ks[1], (vocab_size, vocab_size), jnp.float32)
    scale = 1.0 / jnp.sqrt(jnp.float32(output_dim))
    w_ih = jax.random.uniform(ks[2], (output_dim, vocab_size), jnp.float32, -scale, scale)
    w_hh = jax.random.uniform(ks[3], (output_dim, output_dim), jnp.float32, -scale, scale)
    b_ih = jax.random.uniform(ks[4], (output_dim,), jnp.float32, -scale, scale)
    b_hh = jax.random.uniform(ks[5], (output_dim,), jnp.float32, -scale, scale)
    w_lin = jax.random.uniform(ks[6], (vocab_size, output_dim), jnp.float32, -scale, scale)
    b_lin = jax.random.uniform(ks[7], (vocab_size,), jnp.float32, -scale, scale)

    # f32 output projection keeps the strict 1e-4 match; pass
    # proj_dtype=jnp.bfloat16 for native-rate MXU at real vocab sizes.
    out = ngram_rnn_forward(inputs, emb_w, w_ih, w_hh, b_ih, b_hh, w_lin, b_lin)
    out = jax.block_until_ready(out)

    ref = ngram_rnn_reference(inputs, emb_w, w_ih, w_hh, b_ih, b_hh, w_lin, b_lin)
    assert out.shape == (B, T, vocab_size)
    assert jnp.allclose(out, ref, atol=1e-4, rtol=1e-4), "mismatch vs pure-JAX reference"

    print("KERNEL_OK")
</pallas_src>

<mosaic_0001>
module attributes {stable_mosaic.version = 11 : i64} {
  func.func @ngram_rnn_kernel(%arg0: i32, %arg1: memref<8x8x32xf32, #tpu.memory_space<vmem>>, %arg2: memref<32x32xf32, #tpu.memory_space<vmem>>, %arg3: memref<32x128xf32, #tpu.memory_space<vmem>>, %arg4: memref<1x128xf32, #tpu.memory_space<vmem>>, %arg5: memref<8x8x128xf32, #tpu.memory_space<vmem>>, %arg6: memref<64x32xf32, #tpu.memory_space<vmem>>) attributes {dimension_semantics = [#tpu.dimension_semantics<parallel>], iteration_bounds = array<i64: 1>, scalar_prefetch = 0 : i64, scratch_operands = 1 : i64, tpu.core_type = #tpu.core_type<tc>, window_params = [{transform_indices = @transform_0, window_bounds = array<i64: 8, 8, 32>}, {pipeline_mode = #tpu.pipeline_mode<synchronous>, transform_indices = @transform_1, window_bounds = array<i64: 32, 32>}, {pipeline_mode = #tpu.pipeline_mode<synchronous>, transform_indices = @transform_2, window_bounds = array<i64: 32, 128>}, {pipeline_mode = #tpu.pipeline_mode<synchronous>, transform_indices = @transform_3, window_bounds = array<i64: 1, 128>}, {transform_indices = @transform_4, window_bounds = array<i64: 8, 8, 128>}]} {
    %c0 = arith.constant 0 : index
    %c0_0 = arith.constant 0 : index
    %0 = vector.load %arg2[%c0, %c0_0] : memref<32x32xf32, #tpu.memory_space<vmem>>, vector<32x32xf32>
    %c0_1 = arith.constant 0 : index
    %c0_2 = arith.constant 0 : index
    %c0_3 = arith.constant 0 : index
    %1 = vector.load %arg1[%c0_1, %c0_2, %c0_3] : memref<8x8x32xf32, #tpu.memory_space<vmem>>, vector<1x8x32xf32>
    %2 = vector.shape_cast %1 : vector<1x8x32xf32> to vector<8x32xf32>
    %cst = arith.constant 0.000000e+00 : f32
    %3 = vector.broadcast %cst : f32 to vector<8x32xf32>
    %4 = arith.maximumf %2, %3 : vector<8x32xf32>
    %c0_4 = arith.constant 0 : index
    %c0_5 = arith.constant 0 : index
    %5 = vector.load %arg6[%c0_4, %c0_5] : memref<64x32xf32, #tpu.memory_space<vmem>>, vector<8x32xf32>
    tpu.vector_store %arg6[%c0_4, %c0_5], %4 {strides = array<i32>} : memref<64x32xf32, #tpu.memory_space<vmem>>, vector<8x32xf32>,
    %c1 = arith.constant 1 : index
    %c0_6 = arith.constant 0 : index
    %c0_7 = arith.constant 0 : index
    %6 = vector.load %arg1[%c1, %c0_6, %c0_7] : memref<8x8x32xf32, #tpu.memory_space<vmem>>, vector<1x8x32xf32>
    %7 = vector.shape_cast %6 : vector<1x8x32xf32> to vector<8x32xf32>
    %cst_8 = arith.constant dense<0.000000e+00> : vector<8x32xf32>
    %8 = tpu.matmul %4, %0, %cst_8 {dimension_numbers = #tpu.dot_dimension_numbers<[1], [0], [0], [1], [0, 0, 1, 1], [], []>} : vector<8x32xf32>, vector<32x32xf32>, vector<8x32xf32> -> vector<8x32xf32>
    %9 = arith.addf %7, %8 : vector<8x32xf32>
    %cst_9 = arith.constant 0.000000e+00 : f32
    %10 = vector.broadcast %cst_9 : f32 to vector<8x32xf32>
    %11 = arith.maximumf %9, %10 : vector<8x32xf32>
    %c8 = arith.constant 8 : index
    %c0_10 = arith.constant 0 : index
    %12 = vector.load %arg6[%c8, %c0_10] : memref<64x32xf32, #tpu.memory_space<vmem>>, vector<8x32xf32>
    tpu.vector_store %arg6[%c8, %c0_10], %11 {strides = array<i32>} : memref<64x32xf32, #tpu.memory_space<vmem>>, vector<8x32xf32>,
    %c2 = arith.constant 2 : index
    %c0_11 = arith.constant 0 : index
    %c0_12 = arith.constant 0 : index
    %13 = vector.load %arg1[%c2, %c0_11, %c0_12] : memref<8x8x32xf32, #tpu.memory_space<vmem>>, vector<1x8x32xf32>
    %14 = vector.shape_cast %13 : vector<1x8x32xf32> to vector<8x32xf32>
    %cst_13 = arith.constant dense<0.000000e+00> : vector<8x32xf32>
    %15 = tpu.matmul %11, %0, %cst_13 {dimension_numbers = #tpu.dot_dimension_numbers<[1], [0], [0], [1], [0, 0, 1, 1], [], []>} : vector<8x32xf32>, vector<32x32xf32>, vector<8x32xf32> -> vector<8x32xf32>
    %16 = arith.addf %14, %15 : vector<8x32xf32>
    %cst_14 = arith.constant 0.000000e+00 : f32
    %17 = vector.broadcast %cst_14 : f32 to vector<8x32xf32>
    %18 = arith.maximumf %16, %17 : vector<8x32xf32>
    %c16 = arith.constant 16 : index
    %c0_15 = arith.constant 0 : index
    %19 = vector.load %arg6[%c16, %c0_15] : memref<64x32xf32, #tpu.memory_space<vmem>>, vector<8x32xf32>
    tpu.vector_store %arg6[%c16, %c0_15], %18 {strides = array<i32>} : memref<64x32xf32, #tpu.memory_space<vmem>>, vector<8x32xf32>,
    %c3 = arith.constant 3 : index
    %c0_16 = arith.constant 0 : index
    %c0_17 = arith.constant 0 : index
    %20 = vector.load %arg1[%c3, %c0_16, %c0_17] : memref<8x8x32xf32, #tpu.memory_space<vmem>>, vector<1x8x32xf32>
    %21 = vector.shape_cast %20 : vector<1x8x32xf32> to vector<8x32xf32>
    %cst_18 = arith.constant dense<0.000000e+00> : vector<8x32xf32>
    %22 = tpu.matmul %18, %0, %cst_18 {dimension_numbers = #tpu.dot_dimension_numbers<[1], [0], [0], [1], [0, 0, 1, 1], [], []>} : vector<8x32xf32>, vector<32x32xf32>, vector<8x32xf32> -> vector<8x32xf32>
    %23 = arith.addf %21, %22 : vector<8x32xf32>
    %cst_19 = arith.constant 0.000000e+00 : f32
    %24 = vector.broadcast %cst_19 : f32 to vector<8x32xf32>
    %25 = arith.maximumf %23, %24 : vector<8x32xf32>
    %c24 = arith.constant 24 : index
    %c0_20 = arith.constant 0 : index
    %26 = vector.load %arg6[%c24, %c0_20] : memref<64x32xf32, #tpu.memory_space<vmem>>, vector<8x32xf32>
    tpu.vector_store %arg6[%c24, %c0_20], %25 {strides = array<i32>} : memref<64x32xf32, #tpu.memory_space<vmem>>, vector<8x32xf32>,
    %c4 = arith.constant 4 : index
    %c0_21 = arith.constant 0 : index
    %c0_22 = arith.constant 0 : index
    %27 = vector.load %arg1[%c4, %c0_21, %c0_22] : memref<8x8x32xf32, #tpu.memory_space<vmem>>, vector<1x8x32xf32>
    %28 = vector.shape_cast %27 : vector<1x8x32xf32> to vector<8x32xf32>
    %cst_23 = arith.constant dense<0.000000e+00> : vector<8x32xf32>
    %29 = tpu.matmul %25, %0, %cst_23 {dimension_numbers = #tpu.dot_dimension_numbers<[1], [0], [0], [1], [0, 0, 1, 1], [], []>} : vector<8x32xf32>, vector<32x32xf32>, vector<8x32xf32> -> vector<8x32xf32>
    %30 = arith.addf %28, %29 : vector<8x32xf32>
    %cst_24 = arith.constant 0.000000e+00 : f32
    %31 = vector.broadcast %cst_24 : f32 to vector<8x32xf32>
    %32 = arith.maximumf %30, %31 : vector<8x32xf32>
    %c32 = arith.constant 32 : index
    %c0_25 = arith.constant 0 : index
    %33 = vector.load %arg6[%c32, %c0_25] : memref<64x32xf32, #tpu.memory_space<vmem>>, vector<8x32xf32>
    tpu.vector_store %arg6[%c32, %c0_25], %32 {strides = array<i32>} : memref<64x32xf32, #tpu.memory_space<vmem>>, vector<8x32xf32>,
    %c5 = arith.constant 5 : index
    %c0_26 = arith.constant 0 : index
    %c0_27 = arith.constant 0 : index
    %34 = vector.load %arg1[%c5, %c0_26, %c0_27] : memref<8x8x32xf32, #tpu.memory_space<vmem>>, vector<1x8x32xf32>
    %35 = vector.shape_cast %34 : vector<1x8x32xf32> to vector<8x32xf32>
    %cst_28 = arith.constant dense<0.000000e+00> : vector<8x32xf32>
    %36 = tpu.matmul %32, %0, %cst_28 {dimension_numbers = #tpu.dot_dimension_numbers<[1], [0], [0], [1], [0, 0, 1, 1], [], []>} : vector<8x32xf32>, vector<32x32xf32>, vector<8x32xf32> -> vector<8x32xf32>
    %37 = arith.addf %35, %36 : vector<8x32xf32>
    %cst_29 = arith.constant 0.000000e+00 : f32
    %38 = vector.broadcast %cst_29 : f32 to vector<8x32xf32>
    %39 = arith.maximumf %37, %38 : vector<8x32xf32>
    %c40 = arith.constant 40 : index
    %c0_30 = arith.constant 0 : index
    %40 = vector.load %arg6[%c40, %c0_30] : memref<64x32xf32, #tpu.memory_space<vmem>>, vector<8x32xf32>
    tpu.vector_store %arg6[%c40, %c0_30], %39 {strides = array<i32>} : memref<64x32xf32, #tpu.memory_space<vmem>>, vector<8x32xf32>,
    %c6 = arith.constant 6 : index
    %c0_31 = arith.constant 0 : index
    %c0_32 = arith.constant 0 : index
    %41 = vector.load %arg1[%c6, %c0_31, %c0_32] : memref<8x8x32xf32, #tpu.memory_space<vmem>>, vector<1x8x32xf32>
    %42 = vector.shape_cast %41 : vector<1x8x32xf32> to vector<8x32xf32>
    %cst_33 = arith.constant dense<0.000000e+00> : vector<8x32xf32>
    %43 = tpu.matmul %39, %0, %cst_33 {dimension_numbers = #tpu.dot_dimension_numbers<[1], [0], [0], [1], [0, 0, 1, 1], [], []>} : vector<8x32xf32>, vector<32x32xf32>, vector<8x32xf32> -> vector<8x32xf32>
    %44 = arith.addf %42, %43 : vector<8x32xf32>
    %cst_34 = arith.constant 0.000000e+00 : f32
    %45 = vector.broadcast %cst_34 : f32 to vector<8x32xf32>
    %46 = arith.maximumf %44, %45 : vector<8x32xf32>
    %c48 = arith.constant 48 : index
    %c0_35 = arith.constant 0 : index
    %47 = vector.load %arg6[%c48, %c0_35] : memref<64x32xf32, #tpu.memory_space<vmem>>, vector<8x32xf32>
    tpu.vector_store %arg6[%c48, %c0_35], %46 {strides = array<i32>} : memref<64x32xf32, #tpu.memory_space<vmem>>, vector<8x32xf32>,
    %c7 = arith.constant 7 : index
    %c0_36 = arith.constant 0 : index
    %c0_37 = arith.constant 0 : index
    %48 = vector.load %arg1[%c7, %c0_36, %c0_37] : memref<8x8x32xf32, #tpu.memory_space<vmem>>, vector<1x8x32xf32>
    %49 = vector.shape_cast %48 : vector<1x8x32xf32> to vector<8x32xf32>
    %cst_38 = arith.constant dense<0.000000e+00> : vector<8x32xf32>
    %50 = tpu.matmul %46, %0, %cst_38 {dimension_numbers = #tpu.dot_dimension_numbers<[1], [0], [0], [1], [0, 0, 1, 1], [], []>} : vector<8x32xf32>, vector<32x32xf32>, vector<8x32xf32> -> vector<8x32xf32>
    %51 = arith.addf %49, %50 : vector<8x32xf32>
    %cst_39 = arith.constant 0.000000e+00 : f32
    %52 = vector.broadcast %cst_39 : f32 to vector<8x32xf32>
    %53 = arith.maximumf %51, %52 : vector<8x32xf32>
    %c56 = arith.constant 56 : index
    %c0_40 = arith.constant 0 : index
    %54 = vector.load %arg6[%c56, %c0_40] : memref<64x32xf32, #tpu.memory_space<vmem>>, vector<8x32xf32>
    tpu.vector_store %arg6[%c56, %c0_40], %53 {strides = array<i32>} : memref<64x32xf32, #tpu.memory_space<vmem>>, vector<8x32xf32>,
    %c0_41 = arith.constant 0 : index
    %c0_42 = arith.constant 0 : index
    %55 = vector.load %arg6[%c0_41, %c0_42] : memref<64x32xf32, #tpu.memory_space<vmem>>, vector<64x32xf32>
    %c0_43 = arith.constant 0 : index
    %c0_44 = arith.constant 0 : index
    %56 = vector.load %arg3[%c0_43, %c0_44] : memref<32x128xf32, #tpu.memory_space<vmem>>, vector<32x128xf32>
    %cst_45 = arith.constant dense<0.000000e+00> : vector<64x128xf32>
    %57 = tpu.matmul %55, %56, %cst_45 {dimension_numbers = #tpu.dot_dimension_numbers<[1], [0], [0], [1], [0, 0, 1, 1], [], []>} : vector<64x32xf32>, vector<32x128xf32>, vector<64x128xf32> -> vector<64x128xf32>
    %c0_46 = arith.constant 0 : index
    %c0_47 = arith.constant 0 : index
    %58 = vector.load %arg4[%c0_46, %c0_47] : memref<1x128xf32, #tpu.memory_space<vmem>>, vector<1x128xf32>
    %59 = vector.broadcast %58 : vector<1x128xf32> to vector<64x128xf32>
    %60 = arith.addf %57, %59 : vector<64x128xf32>
    %61 = vector.extract_strided_slice %60 {offsets = [0, 0], sizes = [8, 128], strides = [1, 1]} : vector<64x128xf32> to vector<8x128xf32>
    %c0_48 = arith.constant 0 : index
    %c0_49 = arith.constant 0 : index
    %c0_50 = arith.constant 0 : index
    %62 = vector.load %arg5[%c0_48, %c0_49, %c0_50] : memref<8x8x128xf32, #tpu.memory_space<vmem>>, vector<8x1x128xf32>
    %63 = vector.shape_cast %62 : vector<8x1x128xf32> to vector<8x128xf32>
    %64 = vector.shape_cast %61 : vector<8x128xf32> to vector<8x1x128xf32>
    tpu.vector_store %arg5[%c0_48, %c0_49, %c0_50], %64 {strides = array<i32>} : memref<8x8x128xf32, #tpu.memory_space<vmem>>, vector<8x1x128xf32>,
    %65 = vector.extract_strided_slice %60 {offsets = [8, 0], sizes = [8, 128], strides = [1, 1]} : vector<64x128xf32> to vector<8x128xf32>
    %c0_51 = arith.constant 0 : index
    %c1_52 = arith.constant 1 : index
    %c0_53 = arith.constant 0 : index
    %66 = vector.load %arg5[%c0_51, %c1_52, %c0_53] : memref<8x8x128xf32, #tpu.memory_space<vmem>>, vector<8x1x128xf32>
    %67 = vector.shape_cast %66 : vector<8x1x128xf32> to vector<8x128xf32>
    %68 = vector.shape_cast %65 : vector<8x128xf32> to vector<8x1x128xf32>
    tpu.vector_store %arg5[%c0_51, %c1_52, %c0_53], %68 {strides = array<i32>} : memref<8x8x128xf32, #tpu.memory_space<vmem>>, vector<8x1x128xf32>,
    %69 = vector.extract_strided_slice %60 {offsets = [16, 0], sizes = [8, 128], strides = [1, 1]} : vector<64x128xf32> to vector<8x128xf32>
    %c0_54 = arith.constant 0 : index
    %c2_55 = arith.constant 2 : index
    %c0_56 = arith.constant 0 : index
    %70 = vector.load %arg5[%c0_54, %c2_55, %c0_56] : memref<8x8x128xf32, #tpu.memory_space<vmem>>, vector<8x1x128xf32>
    %71 = vector.shape_cast %70 : vector<8x1x128xf32> to vector<8x128xf32>
    %72 = vector.shape_cast %69 : vector<8x128xf32> to vector<8x1x128xf32>
    tpu.vector_store %arg5[%c0_54, %c2_55, %c0_56], %72 {strides = array<i32>} : memref<8x8x128xf32, #tpu.memory_space<vmem>>, vector<8x1x128xf32>,
    %73 = vector.extract_strided_slice %60 {offsets = [24, 0], sizes = [8, 128], strides = [1, 1]} : vector<64x128xf32> to vector<8x128xf32>
    %c0_57 = arith.constant 0 : index
    %c3_58 = arith.constant 3 : index
    %c0_59 = arith.constant 0 : index
    %74 = vector.load %arg5[%c0_57, %c3_58, %c0_59] : memref<8x8x128xf32, #tpu.memory_space<vmem>>, vector<8x1x128xf32>
    %75 = vector.shape_cast %74 : vector<8x1x128xf32> to vector<8x128xf32>
    %76 = vector.shape_cast %73 : vector<8x128xf32> to vector<8x1x128xf32>
    tpu.vector_store %arg5[%c0_57, %c3_58, %c0_59], %76 {strides = array<i32>} : memref<8x8x128xf32, #tpu.memory_space<vmem>>, vector<8x1x128xf32>,
    %77 = vector.extract_strided_slice %60 {offsets = [32, 0], sizes = [8, 128], strides = [1, 1]} : vector<64x128xf32> to vector<8x128xf32>
    %c0_60 = arith.constant 0 : index
    %c4_61 = arith.constant 4 : index
    %c0_62 = arith.constant 0 : index
    %78 = vector.load %arg5[%c0_60, %c4_61, %c0_62] : memref<8x8x128xf32, #tpu.memory_space<vmem>>, vector<8x1x128xf32>
    %79 = vector.shape_cast %78 : vector<8x1x128xf32> to vector<8x128xf32>
    %80 = vector.shape_cast %77 : vector<8x128xf32> to vector<8x1x128xf32>
    tpu.vector_store %arg5[%c0_60, %c4_61, %c0_62], %80 {strides = array<i32>} : memref<8x8x128xf32, #tpu.memory_space<vmem>>, vector<8x1x128xf32>,
    %81 = vector.extract_strided_slice %60 {offsets = [40, 0], sizes = [8, 128], strides = [1, 1]} : vector<64x128xf32> to vector<8x128xf32>
    %c0_63 = arith.constant 0 : index
    %c5_64 = arith.constant 5 : index
    %c0_65 = arith.constant 0 : index
    %82 = vector.load %arg5[%c0_63, %c5_64, %c0_65] : memref<8x8x128xf32, #tpu.memory_space<vmem>>, vector<8x1x128xf32>
    %83 = vector.shape_cast %82 : vector<8x1x128xf32> to vector<8x128xf32>
    %84 = vector.shape_cast %81 : vector<8x128xf32> to vector<8x1x128xf32>
    tpu.vector_store %arg5[%c0_63, %c5_64, %c0_65], %84 {strides = array<i32>} : memref<8x8x128xf32, #tpu.memory_space<vmem>>, vector<8x1x128xf32>,
    %85 = vector.extract_strided_slice %60 {offsets = [48, 0], sizes = [8, 128], strides = [1, 1]} : vector<64x128xf32> to vector<8x128xf32>
    %c0_66 = arith.constant 0 : index
    %c6_67 = arith.constant 6 : index
    %c0_68 = arith.constant 0 : index
    %86 = vector.load %arg5[%c0_66, %c6_67, %c0_68] : memref<8x8x128xf32, #tpu.memory_space<vmem>>, vector<8x1x128xf32>
    %87 = vector.shape_cast %86 : vector<8x1x128xf32> to vector<8x128xf32>
    %88 = vector.shape_cast %85 : vector<8x128xf32> to vector<8x1x128xf32>
    tpu.vector_store %arg5[%c0_66, %c6_67, %c0_68], %88 {strides = array<i32>} : memref<8x8x128xf32, #tpu.memory_space<vmem>>, vector<8x1x128xf32>,
    %89 = vector.extract_strided_slice %60 {offsets = [56, 0], sizes = [8, 128], strides = [1, 1]} : vector<64x128xf32> to vector<8x128xf32>
    %c0_69 = arith.constant 0 : index
    %c7_70 = arith.constant 7 : index
    %c0_71 = arith.constant 0 : index
    %90 = vector.load %arg5[%c0_69, %c7_70, %c0_71] : memref<8x8x128xf32, #tpu.memory_space<vmem>>, vector<8x1x128xf32>
    %91 = vector.shape_cast %90 : vector<8x1x128xf32> to vector<8x128xf32>
    %92 = vector.shape_cast %89 : vector<8x128xf32> to vector<8x1x128xf32>
    tpu.vector_store %arg5[%c0_69, %c7_70, %c0_71], %92 {strides = array<i32>} : memref<8x8x128xf32, #tpu.memory_space<vmem>>, vector<8x1x128xf32>,
    return
  }
  func.func @transform_0(%arg0: i32) -> (i32, i32, i32) {
    %c0_i32 = arith.constant 0 : i32
    %c0_i32_0 = arith.constant 0 : i32
    %c0_i32_1 = arith.constant 0 : i32
    return %c0_i32, %arg0, %c0_i32_0 : i32, i32, i32
  }
  func.func @transform_1(%arg0: i32) -> (i32, i32) {
    %c0_i32 = arith.constant 0 : i32
    %c0_i32_0 = arith.constant 0 : i32
    %c0_i32_1 = arith.constant 0 : i32
    return %c0_i32, %c0_i32_0 : i32, i32
  }
  func.func @transform_2(%arg0: i32) -> (i32, i32) {
    %c0_i32 = arith.constant 0 : i32
    %c0_i32_0 = arith.constant 0 : i32
    %c0_i32_1 = arith.constant 0 : i32
    return %c0_i32, %c0_i32_0 : i32, i32
  }
  func.func @transform_3(%arg0: i32) -> (i32, i32) {
    %c0_i32 = arith.constant 0 : i32
    %c0_i32_0 = arith.constant 0 : i32
    %c0_i32_1 = arith.constant 0 : i32
    return %c0_i32, %c0_i32_0 : i32, i32
  }
  func.func @transform_4(%arg0: i32) -> (i32, i32, i32) {
    %c0_i32 = arith.constant 0 : i32
    %c0_i32_0 = arith.constant 0 : i32
    %c0_i32_1 = arith.constant 0 : i32
    return %arg0, %c0_i32, %c0_i32_0 : i32, i32, i32
  }
}

</mosaic_0001>

<llo_original>
// kernel: tpu_custom_call.1
$region0: #{tpu_custom_call.1}
  #allocation0 [shape = 'u32[]', space=smem, size = 0x4, offset = 0x4, fixed_abs, tag = 'smem constant byte address 0x4 - core index']
  #allocation1 [shape = 'u32[144,128]{1,0:T(1,128)}', space=vmem, size = 0x12000, scoped, tag = 'internal scratch']
  #allocation2 [shape = 'f32[64,32]{1,0:T(8,128)}', space=vmem, size = 0x8000, scoped, tag = 'scratch operand']
  %s0 = inlined_call_operand.hbm [shape: f32[8,8,32], index: 0, kind: input, shape index: {}]
  %s1 = inlined_call_operand.hbm [shape: f32[32,32], index: 1, kind: input, shape index: {}]
  %s2 = inlined_call_operand.hbm [shape: f32[32,128], index: 2, kind: input, shape index: {}]
  %s3 = inlined_call_operand.vmem [shape: f32[1,128], index: 3, kind: input, shape index: {}]
  %s4 = inlined_call_operand.hbm [shape: f32[8,8,128], index: 4, kind: output, shape index: {}]
  %s5 = sld [smem:[#allocation0]]
  $region38: #{tpu_custom_call.1} parent=0
    _
  %s7 = ssub.s32 1, %s5
  %s8 = scalar_select 0, %s7, %s5
  $region1: #{tpu_custom_call.1} parent=0
    #allocation3 [shape = 'u8[32768]{0}', space=vmem, size = 0x8000, scoped, tag = 'input window, operand 0, single buffered']
    #allocation4 [shape = 's32[1]{0}', space=sflag, size = 0x4, scoped, tag = 'scoped memory for tpu_custom_call.1']
    #allocation5 [shape = 's32[1]{0}', space=sflag, size = 0x4, scoped, tag = 'scoped memory for tpu_custom_call.1']
    #allocation6 [shape = 'u8[16384]{0}', space=vmem, size = 0x4000, scoped, tag = 'input window, operand 1, single buffered']
    #allocation7 [shape = 's32[1]{0}', space=sflag, size = 0x4, scoped, tag = 'scoped memory for tpu_custom_call.1']
    #allocation8 [shape = 'u8[16384]{0}', space=vmem, size = 0x4000, scoped, tag = 'input window, operand 2, single buffered']
    #allocation9 [shape = 'u8[32768]{0}', space=vmem, size = 0x8000, scoped, tag = 'output window, operand 0, single buffered']
    %9 = vsyncpa [#allocation4], 0
    %10 = vsyncpa [#allocation7], 0
    %11 = vsyncpa [#allocation5], 0
    // Predicated region
    $region2: #{tpu_custom_call.1} parent=1 // pred_check
      _
    $region3: #{tpu_custom_call.1} parent=1 // pred_check_branch
      %13 = sbr.rel (0) target = $region5
    $region4: #{tpu_custom_call.1} parent=1 // pred_region
      %s15 = ssub.s32 1024, 1024
      %16 = vsyncadd [#allocation4], %s15
      %s17 = sshll.u32 [#allocation3], 4
      %s18 = int_to_ptr.vmem [resolvable:$true] %s17
      %23 = dma.hbm_to_vmem [thread:$0]  %s0, 1024, %s18, [#allocation4], 128, 128, 8
    $region5: #{tpu_custom_call.1} parent=1 // pred_fallthru
      _
    // Predicated region
    $region6: #{tpu_custom_call.1} parent=1 // pred_check
      _
    $region7: #{tpu_custom_call.1} parent=1 // pred_check_branch
      %25 = sbr.rel (0) target = $region9
    $region8: #{tpu_custom_call.1} parent=1 // pred_region
      %s27 = ssub.s32 512, 512
      %28 = vsyncadd [#allocation7], %s27
      %s29 = sshll.u32 [#allocation6], 4
      %s30 = int_to_ptr.vmem [resolvable:$true] %s29
      %35 = dma.hbm_to_vmem [thread:$0]  %s1, 512, %s30, [#allocation7], 128, 128, 8
    $region9: #{tpu_custom_call.1} parent=1 // pred_fallthru
      _
    // Predicated region
    $region10: #{tpu_custom_call.1} parent=1 // pred_check
      _
    $region11: #{tpu_custom_call.1} parent=1 // pred_check_branch
      %37 = sbr.rel (0) target = $region13
    $region12: #{tpu_custom_call.1} parent=1 // pred_region
      %s39 = ssub.s32 512, 512
      %40 = vsyncadd [#allocation7], %s39
      %s41 = sshll.u32 [#allocation8], 4
      %s42 = int_to_ptr.vmem [resolvable:$true] %s41
      %47 = dma.hbm_to_vmem [thread:$0]  %s2, 512, %s42, [#allocation7], 128, 128, 8
    $region13: #{tpu_custom_call.1} parent=1 // pred_fallthru
      _
    // Predicated region
    $region14: #{tpu_custom_call.1} parent=1 // pred_check
      _
    $region15: #{tpu_custom_call.1} parent=1 // pred_check_branch
      %49 = sbr.rel (0) target = $region17
    $region16: #{tpu_custom_call.1} parent=1 // pred_region
      _
    $region17: #{tpu_custom_call.1} parent=1 // pred_fallthru
      _
    // Predicated region
    $region18: #{tpu_custom_call.1} parent=1 // pred_check
      _
    $region19: #{tpu_custom_call.1} parent=1 // pred_check_branch
      %51 = sbr.rel (0) target = $region21
    $region20: #{tpu_custom_call.1} parent=1 // pred_region
      %52 = dma.done [#allocation4], 1024
    $region21: #{tpu_custom_call.1} parent=1 // pred_fallthru
      _
    // Predicated region
    $region22: #{tpu_custom_call.1} parent=1 // pred_check
      _
    $region23: #{tpu_custom_call.1} parent=1 // pred_check_branch
      %54 = sbr.rel (0) target = $region25
    $region24: #{tpu_custom_call.1} parent=1 // pred_region
      %55 = dma.done [#allocation7], 512
    $region25: #{tpu_custom_call.1} parent=1 // pred_fallthru
      _
    // Predicated region
    $region26: #{tpu_custom_call.1} parent=1 // pred_check
      _
    $region27: #{tpu_custom_call.1} parent=1 // pred_check_branch
      %57 = sbr.rel (0) target = $region29
    $region28: #{tpu_custom_call.1} parent=1 // pred_region
      %58 = dma.done [#allocation7], 512
    $region29: #{tpu_custom_call.1} parent=1 // pred_fallthru
      _
    %v59 = vld [vmem:[#allocation6] sm:$0xff]
    %v60 = vld [vmem:[#allocation6 + $0x8] sm:$0xff]
    %v61 = vld [vmem:[#allocation6 + $0x10] sm:$0xff]
    %v62 = vld [vmem:[#allocation6 + $0x18] sm:$0xff]
    %v63 = vld [vmem:[#allocation3] sm:$0xff]
    %v64 = vmax.f32 %v63, 0.0
    %vm65 = vcmask 261120
    %66 = vst.msk [vmem:[#allocation2] sm:$0xff] %vm65, %v64
    %s67 = scalar_lea.vmem [#allocation3], 8
    %v68 = vld [vmem:[%s67] sm:$0xff]
    %v70 = vsel %vm65, %v64, 0
    %72 = vmatprep.subr.mxu0 0.0
    %73 = vmatpush1.msra.mxu0 0.0
    %74 = vmatprep.subr.mxu0 0.0
    %75 = vmatpush1.msra.mxu0 0.0
    %76 = vmatprep.subr.mxu0 0.0
    %77 = vmatpush1.msra.mxu0 0.0
    %78 = vmatprep.subr.mxu0 0.0
    %79 = vmatpush1.msra.mxu0 0.0
    %80 = vmatprep.subr.mxu0 0.0
    %81 = vmatpush1.msra.mxu0 0.0
    %82 = vmatprep.subr.mxu0 0.0
    %83 = vmatpush1.msra.mxu0 0.0
    %84 = vmatprep.subr.mxu0 0.0
    %85 = vmatpush1.msra.mxu0 0.0
    %86 = vmatprep.subr.mxu0 0.0
    %87 = vmatpush1.msra.mxu0 0.0
    %88 = vmatprep.subr.mxu0 0.0
    %89 = vmatpush1.msra.mxu0 0.0
    %90 = vmatprep.subr.mxu0 0.0
    %91 = vmatpush1.msra.mxu0 0.0
    %92 = vmatprep.subr.mxu0 0.0
    %93 = vmatpush1.msra.mxu0 0.0
    %94 = vmatprep.subr.mxu0 0.0
    %95 = vmatpush1.msra.mxu0 0.0
    %96 = vmatprep.subr.mxu0 0.0
    %97 = vmatpush1.msra.mxu0 %v62
    %98 = vmatprep.subr.mxu0 0.0
    %99 = vmatpush1.msra.mxu0 %v61
    %100 = vmatprep.subr.mxu0 0.0
    %101 = vmatpush1.msra.mxu0 %v60
    %102 = vmatprep.subr.mxu0 0.0
    %103 = vmatpush1.msra.mxu0 %v59
    %104 = vmatprep.subr.mxu0 0.0
    %105 = vmatpush2.msra.mxu0 0.0
    %106 = vmatprep.subr.mxu0 0.0
    %107 = vmatpush2.msra.mxu0 0.0
    %108 = vmatprep.subr.mxu0 0.0
    %109 = vmatpush2.msra.mxu0 0.0
    %110 = vmatprep.subr.mxu0 0.0
    %111 = vmatpush2.msra.mxu0 0.0
    %112 = vmatprep.subr.mxu0 0.0
    %113 = vmatpush2.msra.mxu0 0.0
    %114 = vmatprep.subr.mxu0 0.0
    %115 = vmatpush2.msra.mxu0 0.0
    %116 = vmatprep.subr.mxu0 0.0
    %117 = vmatpush2.msra.mxu0 0.0
    %118 = vmatprep.subr.mxu0 0.0
    %119 = vmatpush2.msra.mxu0 0.0
    %120 = vmatprep.subr.mxu0 0.0
    %121 = vmatpush2.msra.mxu0 0.0
    %122 = vmatprep.subr.mxu0 0.0
    %123 = vmatpush2.msra.mxu0 0.0
    %124 = vmatprep.subr.mxu0 0.0
    %125 = vmatpush2.msra.mxu0 0.0
    %126 = vmatprep.subr.mxu0 0.0
    %127 = vmatpush2.msra.mxu0 0.0
    %128 = vmatprep.subr.mxu0 0.0
    %129 = vmatpush2.msra.mxu0 0.0
    %130 = vmatprep.subr.mxu0 0.0
    %131 = vmatpush2.msra.mxu0 0.0
    %132 = vmatprep.subr.mxu0 0.0
    %133 = vmatpush2.msra.mxu0 0.0
    %134 = vmatprep.subr.mxu0 0.0
    %135 = vmatpush2.msra.mxu0 0.0
    %136 = vmatprep.mubr.f32.mxu0 0.0
    %137 = vmatmul.mubr.f32.gmra.mxu0 %v70
    %v138 = vpop.f32.mrf.mxu0
    %v139 = vadd.f32 0.0, %v138
    %v140 = vpop.f32.mrf.mxu0
    %141 = vdwg.mxu0
    %v142 = vadd.f32 %v68, %v139
    %v143 = vmax.f32 %v142, 0.0
    %144 = vst.msk [vmem:[#allocation2 + $0x8] sm:$0xff] %vm65, %v143
    %s145 = scalar_lea.vmem [#allocation3], 16
    %v146 = vld [vmem:[%s145] sm:$0xff]
    %v148 = vsel %vm65, %v143, 0
    %150 = vmatprep.subr.mxu0 0.0
    %151 = vmatpush1.msra.mxu0 0.0
    %152 = vmatprep.subr.mxu0 0.0
    %153 = vmatpush1.msra.mxu0 0.0
    %154 = vmatprep.subr.mxu0 0.0
    %155 = vmatpush1.msra.mxu0 0.0
    %156 = vmatprep.subr.mxu0 0.0
    %157 = vmatpush1.msra.mxu0 0.0
    %158 = vmatprep.subr.mxu0 0.0
    %159 = vmatpush1.msra.mxu0 0.0
    %160 = vmatprep.subr.mxu0 0.0
    %161 = vmatpush1.msra.mxu0 0.0
    %162 = vmatprep.subr.mxu0 0.0
    %163 = vmatpush1.msra.mxu0 0.0
    %164 = vmatprep.subr.mxu0 0.0
    %165 = vmatpush1.msra.mxu0 0.0
    %166 = vmatprep.subr.mxu0 0.0
    %167 = vmatpush1.msra.mxu0 0.0
    %168 = vmatprep.subr.mxu0 0.0
    %169 = vmatpush1.msra.mxu0 0.0
    %170 = vmatprep.subr.mxu0 0.0
    %171 = vmatpush1.msra.mxu0 0.0
    %172 = vmatprep.subr.mxu0 0.0
    %173 = vmatpush1.msra.mxu0 0.0
    %174 = vmatprep.subr.mxu0 0.0
    %175 = vmatpush1.msra.mxu0 %v62
    %176 = vmatprep.subr.mxu0 0.0
    %177 = vmatpush1.msra.mxu0 %v61
    %178 = vmatprep.subr.mxu0 0.0
    %179 = vmatpush1.msra.mxu0 %v60
    %180 = vmatprep.subr.mxu0 0.0
    %181 = vmatpush1.msra.mxu0 %v59
    %182 = vmatprep.subr.mxu0 0.0
    %183 = vmatpush2.msra.mxu0 0.0
    %184 = vmatprep.subr.mxu0 0.0
    %185 = vmatpush2.msra.mxu0 0.0
    %186 = vmatprep.subr.mxu0 0.0
    %187 = vmatpush2.msra.mxu0 0.0
    %188 = vmatprep.subr.mxu0 0.0
    %189 = vmatpush2.msra.mxu0 0.0
    %190 = vmatprep.subr.mxu0 0.0
    %191 = vmatpush2.msra.mxu0 0.0
    %192 = vmatprep.subr.mxu0 0.0
    %193 = vmatpush2.msra.mxu0 0.0
    %194 = vmatprep.subr.mxu0 0.0
    %195 = vmatpush2.msra.mxu0 0.0
    %196 = vmatprep.subr.mxu0 0.0
    %197 = vmatpush2.msra.mxu0 0.0
    %198 = vmatprep.subr.mxu0 0.0
    %199 = vmatpush2.msra.mxu0 0.0
    %200 = vmatprep.subr.mxu0 0.0
    %201 = vmatpush2.msra.mxu0 0.0
    %202 = vmatprep.subr.mxu0 0.0
    %203 = vmatpush2.msra.mxu0 0.0
    %204 = vmatprep.subr.mxu0 0.0
    %205 = vmatpush2.msra.mxu0 0.0
    %206 = vmatprep.subr.mxu0 0.0
    %207 = vmatpush2.msra.mxu0 0.0
    %208 = vmatprep.subr.mxu0 0.0
    %209 = vmatpush2.msra.mxu0 0.0
    %210 = vmatprep.subr.mxu0 0.0
    %211 = vmatpush2.msra.mxu0 0.0
    %212 = vmatprep.subr.mxu0 0.0
    %213 = vmatpush2.msra.mxu0 0.0
    %214 = vmatprep.mubr.f32.mxu0 0.0
    %215 = vmatmul.mubr.f32.gmra.mxu0 %v148
    %v216 = vpop.f32.mrf.mxu0
    %v217 = vadd.f32 0.0, %v216
    %v218 = vpop.f32.mrf.mxu0
    %219 = vdwg.mxu0
    %v220 = vadd.f32 %v146, %v217
    %v221 = vmax.f32 %v220, 0.0
    %222 = vst.msk [vmem:[#allocation2 + $0x10] sm:$0xff] %vm65, %v221
    %s223 = scalar_lea.vmem [#allocation3], 24
    %v224 = vld [vmem:[%s223] sm:$0xff]
    %v226 = vsel %vm65, %v221, 0
    %228 = vmatprep.subr.mxu0 0.0
    %229 = vmatpush1.msra.mxu0 0.0
    %230 = vmatprep.subr.mxu0 0.0
    %231 = vmatpush1.msra.mxu0 0.0
    %232 = vmatprep.subr.mxu0 0.0
    %233 = vmatpush1.msra.mxu0 0.0
    %234 = vmatprep.subr.mxu0 0.0
    %235 = vmatpush1.msra.mxu0 0.0
    %236 = vmatprep.subr.mxu0 0.0
    %237 = vmatpush1.msra.mxu0 0.0
    %238 = vmatprep.subr.mxu0 0.0
    %239 = vmatpush1.msra.mxu0 0.0
    %240 = vmatprep.subr.mxu0 0.0
    %241 = vmatpush1.msra.mxu0 0.0
    %242 = vmatprep.subr.mxu0 0.0
    %243 = vmatpush1.msra.mxu0 0.0
    %244 = vmatprep.subr.mxu0 0.0
    %245 = vmatpush1.msra.mxu0 0.0
    %246 = vmatprep.subr.mxu0 0.0
    %247 = vmatpush1.msra.mxu0 0.0
    %248 = vmatprep.subr.mxu0 0.0
    %249 = vmatpush1.msra.mxu0 0.0
    %250 = vmatprep.subr.mxu0 0.0
    %251 = vmatpush1.msra.mxu0 0.0
    %252 = vmatprep.subr.mxu0 0.0
    %253 = vmatpush1.msra.mxu0 %v62
    %254 = vmatprep.subr.mxu0 0.0
    %255 = vmatpush1.msra.mxu0 %v61
    %256 = vmatprep.subr.mxu0 0.0
    %257 = vmatpush1.msra.mxu0 %v60
    %258 = vmatprep.subr.mxu0 0.0
    %259 = vmatpush1.msra.mxu0 %v59
    %260 = vmatprep.subr.mxu0 0.0
    %261 = vmatpush2.msra.mxu0 0.0
    %262 = vmatprep.subr.mxu0 0.0
    %263 = vmatpush2.msra.mxu0 0.0
    %264 = vmatprep.subr.mxu0 0.0
    %265 = vmatpush2.msra.mxu0 0.0
    %266 = vmatprep.subr.mxu0 0.0
    %267 = vmatpush2.msra.mxu0 0.0
    %268 = vmatprep.subr.mxu0 0.0
    %269 = vmatpush2.msra.mxu0 0.0
    %270 = vmatprep.subr.mxu0 0.0
    %271 = vmatpush2.msra.mxu0 0.0
    %272 = vmatprep.subr.mxu0 0.0
    %273 = vmatpush2.msra.mxu0 0.0
    %274 = vmatprep.subr.mxu0 0.0
    %275 = vmatpush2.msra.mxu0 0.0
    %276 = vmatprep.subr.mxu0 0.0
    %277 = vmatpush2.msra.mxu0 0.0
    %278 = vmatprep.subr.mxu0 0.0
    %279 = vmatpush2.msra.mxu0 0.0
    %280 = vmatprep.subr.mxu0 0.0
    %281 = vmatpush2.msra.mxu0 0.0
    %282 = vmatprep.subr.mxu0 0.0
    %283 = vmatpush2.msra.mxu0 0.0
    %284 = vmatprep.subr.mxu0 0.0
    %285 = vmatpush2.msra.mxu0 0.0
    %286 = vmatprep.subr.mxu0 0.0
    %287 = vmatpush2.msra.mxu0 0.0
    %288 = vmatprep.subr.mxu0 0.0
    %289 = vmatpush2.msra.mxu0 0.0
    %290 = vmatprep.subr.mxu0 0.0
    %291 = vmatpush2.msra.mxu0 0.0
    %292 = vmatprep.mubr.f32.mxu0 0.0
    %293 = vmatmul.mubr.f32.gmra.mxu0 %v226
    %v294 = vpop.f32.mrf.mxu0
    %v295 = vadd.f32 0.0, %v294
    %v296 = vpop.f32.mrf.mxu0
    %297 = vdwg.mxu0
    %v298 = vadd.f32 %v224, %v295
    %v299 = vmax.f32 %v298, 0.0
    %300 = vst.msk [vmem:[#allocation2 + $0x18] sm:$0xff] %vm65, %v299
    %s301 = scalar_lea.vmem [#allocation3], 32
    %v302 = vld [vmem:[%s301] sm:$0xff]
    %v304 = vsel %vm65, %v299, 0
    %306 = vmatprep.subr.mxu0 0.0
    %307 = vmatpush1.msra.mxu0 0.0
    %308 = vmatprep.subr.mxu0 0.0
    %309 = vmatpush1.msra.mxu0 0.0
    %310 = vmatprep.subr.mxu0 0.0
    %311 = vmatpush1.msra.mxu0 0.0
    %312 = vmatprep.subr.mxu0 0.0
    %313 = vmatpush1.msra.mxu0 0.0
    %314 = vmatprep.subr.mxu0 0.0
    %315 = vmatpush1.msra.mxu0 0.0
    %316 = vmatprep.subr.mxu0 0.0
    %317 = vmatpush1.msra.mxu0 0.0
    %318 = vmatprep.subr.mxu0 0.0
    %319 = vmatpush1.msra.mxu0 0.0
    %320 = vmatprep.subr.mxu0 0.0
    %321 = vmatpush1.msra.mxu0 0.0
    %322 = vmatprep.subr.mxu0 0.0
    %323 = vmatpush1.msra.mxu0 0.0
    %324 = vmatprep.subr.mxu0 0.0
    %325 = vmatpush1.msra.mxu0 0.0
    %326 = vmatprep.subr.mxu0 0.0
    %327 = vmatpush1.msra.mxu0 0.0
    %328 = vmatprep.subr.mxu0 0.0
    %329 = vmatpush1.msra.mxu0 0.0
    %330 = vmatprep.subr.mxu0 0.0
    %331 = vmatpush1.msra.mxu0 %v62
    %332 = vmatprep.subr.mxu0 0.0
    %333 = vmatpush1.msra.mxu0 %v61
    %334 = vmatprep.subr.mxu0 0.0
    %335 = vmatpush1.msra.mxu0 %v60
    %336 = vmatprep.subr.mxu0 0.0
    %337 = vmatpush1.msra.mxu0 %v59
    %338 = vmatprep.subr.mxu0 0.0
    %339 = vmatpush2.msra.mxu0 0.0
    %340 = vmatprep.subr.mxu0 0.0
    %341 = vmatpush2.msra.mxu0 0.0
    %342 = vmatprep.subr.mxu0 0.0
    %343 = vmatpush2.msra.mxu0 0.0
    %344 = vmatprep.subr.mxu0 0.0
    %345 = vmatpush2.msra.mxu0 0.0
    %346 = vmatprep.subr.mxu0 0.0
    %347 = vmatpush2.msra.mxu0 0.0
    %348 = vmatprep.subr.mxu0 0.0
    %349 = vmatpush2.msra.mxu0 0.0
    %350 = vmatprep.subr.mxu0 0.0
    %351 = vmatpush2.msra.mxu0 0.0
    %352 = vmatprep.subr.mxu0 0.0
    %353 = vmatpush2.msra.mxu0 0.0
    %354 = vmatprep.subr.mxu0 0.0
    %355 = vmatpush2.msra.mxu0 0.0
    %356 = vmatprep.subr.mxu0 0.0
    %357 = vmatpush2.msra.mxu0 0.0
    %358 = vmatprep.subr.mxu0 0.0
    %359 = vmatpush2.msra.mxu0 0.0
    %360 = vmatprep.subr.mxu0 0.0
    %361 = vmatpush2.msra.mxu0 0.0
    %362 = vmatprep.subr.mxu0 0.0
    %363 = vmatpush2.msra.mxu0 0.0
    %364 = vmatprep.subr.mxu0 0.0
    %365 = vmatpush2.msra.mxu0 0.0
    %366 = vmatprep.subr.mxu0 0.0
    %367 = vmatpush2.msra.mxu0 0.0
    %368 = vmatprep.subr.mxu0 0.0
    %369 = vmatpush2.msra.mxu0 0.0
    %370 = vmatprep.mubr.f32.mxu0 0.0
    %371 = vmatmul.mubr.f32.gmra.mxu0 %v304
    %v372 = vpop.f32.mrf.mxu0
    %v373 = vadd.f32 0.0, %v372
    %v374 = vpop.f32.mrf.mxu0
    %375 = vdwg.mxu0
    %v376 = vadd.f32 %v302, %v373
    %v377 = vmax.f32 %v376, 0.0
    %378 = vst.msk [vmem:[#allocation2 + $0x20] sm:$0xff] %vm65, %v377
    %s379 = scalar_lea.vmem [#allocation3], 40
    %v380 = vld [vmem:[%s379] sm:$0xff]
    %v382 = vsel %vm65, %v377, 0
    %384 = vmatprep.subr.mxu0 0.0
    %385 = vmatpush1.msra.mxu0 0.0
    %386 = vmatprep.subr.mxu0 0.0
    %387 = vmatpush1.msra.mxu0 0.0
    %388 = vmatprep.subr.mxu0 0.0
    %389 = vmatpush1.msra.mxu0 0.0
    %390 = vmatprep.subr.mxu0 0.0
    %391 = vmatpush1.msra.mxu0 0.0
    %392 = vmatprep.subr.mxu0 0.0
    %393 = vmatpush1.msra.mxu0 0.0
    %394 = vmatprep.subr.mxu0 0.0
    %395 = vmatpush1.msra.mxu0 0.0
    %396 = vmatprep.subr.mxu0 0.0
    %397 = vmatpush1.msra.mxu0 0.0
    %398 = vmatprep.subr.mxu0 0.0
    %399 = vmatpush1.msra.mxu0 0.0
    %400 = vmatprep.subr.mxu0 0.0
    %401 = vmatpush1.msra.mxu0 0.0
    %402 = vmatprep.subr.mxu0 0.0
    %403 = vmatpush1.msra.mxu0 0.0
    %404 = vmatprep.subr.mxu0 0.0
    %405 = vmatpush1.msra.mxu0 0.0
    %406 = vmatprep.subr.mxu0 0.0
    %407 = vmatpush1.msra.mxu0 0.0
    %408 = vmatprep.subr.mxu0 0.0
    %409 = vmatpush1.msra.mxu0 %v62
    %410 = vmatprep.subr.mxu0 0.0
    %411 = vmatpush1.msra.mxu0 %v61
    %412 = vmatprep.subr.mxu0 0.0
    %413 = vmatpush1.msra.mxu0 %v60
    %414 = vmatprep.subr.mxu0 0.0
    %415 = vmatpush1.msra.mxu0 %v59
    %416 = vmatprep.subr.mxu0 0.0
    %417 = vmatpush2.msra.mxu0 0.0
    %418 = vmatprep.subr.mxu0 0.0
    %419 = vmatpush2.msra.mxu0 0.0
    %420 = vmatprep.subr.mxu0 0.0
    %421 = vmatpush2.msra.mxu0 0.0
    %422 = vmatprep.subr.mxu0 0.0
    %423 = vmatpush2.msra.mxu0 0.0
    %424 = vmatprep.subr.mxu0 0.0
    %425 = vmatpush2.msra.mxu0 0.0
    %426 = vmatprep.subr.mxu0 0.0
    %427 = vmatpush2.msra.mxu0 0.0
    %428 = vmatprep.subr.mxu0 0.0
    %429 = vmatpush2.msra.mxu0 0.0
    %430 = vmatprep.subr.mxu0 0.0
    %431 = vmatpush2.msra.mxu0 0.0
    %432 = vmatprep.subr.mxu0 0.0
    %433 = vmatpush2.msra.mxu0 0.0
    %434 = vmatprep.subr.mxu0 0.0
    %435 = vmatpush2.msra.mxu0 0.0
    %436 = vmatprep.subr.mxu0 0.0
    %437 = vmatpush2.msra.mxu0 0.0
    %438 = vmatprep.subr.mxu0 0.0
    %439 = vmatpush2.msra.mxu0 0.0
    %440 = vmatprep.subr.mxu0 0.0
    %441 = vmatpush2.msra.mxu0 0.0
    %442 = vmatprep.subr.mxu0 0.0
    %443 = vmatpush2.msra.mxu0 0.0
    %444 = vmatprep.subr.mxu0 0.0
    %445 = vmatpush2.msra.mxu0 0.0
    %446 = vmatprep.subr.mxu0 0.0
    %447 = vmatpush2.msra.mxu0 0.0
    %448 = vmatprep.mubr.f32.mxu0 0.0
    %449 = vmatmul.mubr.f32.gmra.mxu0 %v382
    %v450 = vpop.f32.mrf.mxu0
    %v451 = vadd.f32 0.0, %v450
    %v452 = vpop.f32.mrf.mxu0
    %453 = vdwg.mxu0
    %v454 = vadd.f32 %v380, %v451
    %v455 = vmax.f32 %v454, 0.0
    %456 = vst.msk [vmem:[#allocation2 + $0x28] sm:$0xff] %vm65, %v455
    %s457 = scalar_lea.vmem [#allocation3], 48
    %v458 = vld [vmem:[%s457] sm:$0xff]
    %v460 = vsel %vm65, %v455, 0
    %462 = vmatprep.subr.mxu0 0.0
    %463 = vmatpush1.msra.mxu0 0.0
    %464 = vmatprep.subr.mxu0 0.0
    %465 = vmatpush1.msra.mxu0 0.0
    %466 = vmatprep.subr.mxu0 0.0
    %467 = vmatpush1.msra.mxu0 0.0
    %468 = vmatprep.subr.mxu0 0.0
    %469 = vmatpush1.msra.mxu0 0.0
    %470 = vmatprep.subr.mxu0 0.0
    %471 = vmatpush1.msra.mxu0 0.0
    %472 = vmatprep.subr.mxu0 0.0
    %473 = vmatpush1.msra.mxu0 0.0
    %474 = vmatprep.subr.mxu0 0.0
    %475 = vmatpush1.msra.mxu0 0.0
    %476 = vmatprep.subr.mxu0 0.0
    %477 = vmatpush1.msra.mxu0 0.0
    %478 = vmatprep.subr.mxu0 0.0
    %479 = vmatpush1.msra.mxu0 0.0
    %480 = vmatprep.subr.mxu0 0.0
    %481 = vmatpush1.msra.mxu0 0.0
    %482 = vmatprep.subr.mxu0 0.0
    %483 = vmatpush1.msra.mxu0 0.0
    %484 = vmatprep.subr.mxu0 0.0
    %485 = vmatpush1.msra.mxu0 0.0
    %486 = vmatprep.subr.mxu0 0.0
    %487 = vmatpush1.msra.mxu0 %v62
    %488 = vmatprep.subr.mxu0 0.0
    %489 = vmatpush1.msra.mxu0 %v61
    %490 = vmatprep.subr.mxu0 0.0
    %491 = vmatpush1.msra.mxu0 %v60
    %492 = vmatprep.subr.mxu0 0.0
    %493 = vmatpush1.msra.mxu0 %v59
    %494 = vmatprep.subr.mxu0 0.0
    %495 = vmatpush2.msra.mxu0 0.0
    %496 = vmatprep.subr.mxu0 0.0
    %497 = vmatpush2.msra.mxu0 0.0
    %498 = vmatprep.subr.mxu0 0.0
    %499 = vmatpush2.msra.mxu0 0.0
    %500 = vmatprep.subr.mxu0 0.0
    %501 = vmatpush2.msra.mxu0 0.0
    %502 = vmatprep.subr.mxu0 0.0
    %503 = vmatpush2.msra.mxu0 0.0
    %504 = vmatprep.subr.mxu0 0.0
    %505 = vmatpush2.msra.mxu0 0.0
    %506 = vmatprep.subr.mxu0 0.0
    %507 = vmatpush2.msra.mxu0 0.0
    %508 = vmatprep.subr.mxu0 0.0
    %509 = vmatpush2.msra.mxu0 0.0
    %510 = vmatprep.subr.mxu0 0.0
    %511 = vmatpush2.msra.mxu0 0.0
    %512 = vmatprep.subr.mxu0 0.0
    %513 = vmatpush2.msra.mxu0 0.0
    %514 = vmatprep.subr.mxu0 0.0
    %515 = vmatpush2.msra.mxu0 0.0
    %516 = vmatprep.subr.mxu0 0.0
    %517 = vmatpush2.msra.mxu0 0.0
    %518 = vmatprep.subr.mxu0 0.0
    %519 = vmatpush2.msra.mxu0 0.0
    %520 = vmatprep.subr.mxu0 0.0
    %521 = vmatpush2.msra.mxu0 0.0
    %522 = vmatprep.subr.mxu0 0.0
    %523 = vmatpush2.msra.mxu0 0.0
    %524 = vmatprep.subr.mxu0 0.0
    %525 = vmatpush2.msra.mxu0 0.0
    %526 = vmatprep.mubr.f32.mxu0 0.0
    %527 = vmatmul.mubr.f32.gmra.mxu0 %v460
    %v528 = vpop.f32.mrf.mxu0
    %v529 = vadd.f32 0.0, %v528
    %v530 = vpop.f32.mrf.mxu0
    %531 = vdwg.mxu0
    %v532 = vadd.f32 %v458, %v529
    %v533 = vmax.f32 %v532, 0.0
    %534 = vst.msk [vmem:[#allocation2 + $0x30] sm:$0xff] %vm65, %v533
    %s535 = scalar_lea.vmem [#allocation3], 56
    %v536 = vld [vmem:[%s535] sm:$0xff]
    %v538 = vsel %vm65, %v533, 0
    %540 = vmatprep.subr.mxu0 0.0
    %541 = vmatpush1.msra.mxu0 0.0
    %542 = vmatprep.subr.mxu0 0.0
    %543 = vmatpush1.msra.mxu0 0.0
    %544 = vmatprep.subr.mxu0 0.0
    %545 = vmatpush1.msra.mxu0 0.0
    %546 = vmatprep.subr.mxu0 0.0
    %547 = vmatpush1.msra.mxu0 0.0
    %548 = vmatprep.subr.mxu0 0.0
    %549 = vmatpush1.msra.mxu0 0.0
    %550 = vmatprep.subr.mxu0 0.0
    %551 = vmatpush1.msra.mxu0 0.0
    %552 = vmatprep.subr.mxu0 0.0
    %553 = vmatpush1.msra.mxu0 0.0
    %554 = vmatprep.subr.mxu0 0.0
    %555 = vmatpush1.msra.mxu0 0.0
    %556 = vmatprep.subr.mxu0 0.0
    %557 = vmatpush1.msra.mxu0 0.0
    %558 = vmatprep.subr.mxu0 0.0
    %559 = vmatpush1.msra.mxu0 0.0
    %560 = vmatprep.subr.mxu0 0.0
    %561 = vmatpush1.msra.mxu0 0.0
    %562 = vmatprep.subr.mxu0 0.0
    %563 = vmatpush1.msra.mxu0 0.0
    %564 = vmatprep.subr.mxu0 0.0
    %565 = vmatpush1.msra.mxu0 %v62
    %566 = vmatprep.subr.mxu0 0.0
    %567 = vmatpush1.msra.mxu0 %v61
    %568 = vmatprep.subr.mxu0 0.0
    %569 = vmatpush1.msra.mxu0 %v60
    %570 = vmatprep.subr.mxu0 0.0
    %571 = vmatpush1.msra.mxu0 %v59
    %572 = vmatprep.subr.mxu0 0.0
    %573 = vmatpush2.msra.mxu0 0.0
    %574 = vmatprep.subr.mxu0 0.0
    %575 = vmatpush2.msra.mxu0 0.0
    %576 = vmatprep.subr.mxu0 0.0
    %577 = vmatpush2.msra.mxu0 0.0
    %578 = vmatprep.subr.mxu0 0.0
    %579 = vmatpush2.msra.mxu0 0.0
    %580 = vmatprep.subr.mxu0 0.0
    %581 = vmatpush2.msra.mxu0 0.0
    %582 = vmatprep.subr.mxu0 0.0
    %583 = vmatpush2.msra.mxu0 0.0
    %584 = vmatprep.subr.mxu0 0.0
    %585 = vmatpush2.msra.mxu0 0.0
    %586 = vmatprep.subr.mxu0 0.0
    %587 = vmatpush2.msra.mxu0 0.0
    %588 = vmatprep.subr.mxu0 0.0
    %589 = vmatpush2.msra.mxu0 0.0
    %590 = vmatprep.subr.mxu0 0.0
    %591 = vmatpush2.msra.mxu0 0.0
    %592 = vmatprep.subr.mxu0 0.0
    %593 = vmatpush2.msra.mxu0 0.0
    %594 = vmatprep.subr.mxu0 0.0
    %595 = vmatpush2.msra.mxu0 0.0
    %596 = vmatprep.subr.mxu0 0.0
    %597 = vmatpush2.msra.mxu0 0.0
    %598 = vmatprep.subr.mxu0 0.0
    %599 = vmatpush2.msra.mxu0 0.0
    %600 = vmatprep.subr.mxu0 0.0
    %601 = vmatpush2.msra.mxu0 0.0
    %602 = vmatprep.subr.mxu0 0.0
    %603 = vmatpush2.msra.mxu0 0.0
    %604 = vmatprep.mubr.f32.mxu0 0.0
    %605 = vmatmul.mubr.f32.gmra.mxu0 %v538
    %v606 = vpop.f32.mrf.mxu0
    %v607 = vadd.f32 0.0, %v606
    %v608 = vpop.f32.mrf.mxu0
    %609 = vdwg.mxu0
    %v610 = vadd.f32 %v536, %v607
    %v611 = vmax.f32 %v610, 0.0
    %612 = vst.msk [vmem:[#allocation2 + $0x38] sm:$0xff] %vm65, %v611
    %v613 = vld [vmem:[#allocation2] sm:$0xff]
    %v614 = vld [vmem:[#allocation2 + $0x8] sm:$0xff]
    %v615 = vld [vmem:[#allocation2 + $0x10] sm:$0xff]
    %v616 = vld [vmem:[#allocation2 + $0x18] sm:$0xff]
    %v617 = vld [vmem:[#allocation2 + $0x20] sm:$0xff]
    %v618 = vld [vmem:[#allocation2 + $0x28] sm:$0xff]
    %v619 = vld [vmem:[#allocation2 + $0x30] sm:$0xff]
    %v620 = vld [vmem:[#allocation2 + $0x38] sm:$0xff]
    %v621 = vld [vmem:[#allocation8] sm:$0xff]
    %v622 = vld [vmem:[#allocation8 + $0x8] sm:$0xff]
    %v623 = vld [vmem:[#allocation8 + $0x10] sm:$0xff]
    %v624 = vld [vmem:[#allocation8 + $0x18] sm:$0xff]
    %v625 = vld [vmem:[%s3] sm:$0x1]
    %v627 = vlaneseq
    %v628 = vshrl.u32 %v627, 7
    %v629 = vsub.s32 0, %v628
    %v630 = vrot.slane %v625, %v629
    %v633 = vsel %vm65, %v613, 0
    %v636 = vsel %vm65, %v614, 0
    %v639 = vsel %vm65, %v615, 0
    %v642 = vsel %vm65, %v616, 0
    %v645 = vsel %vm65, %v617, 0
    %v648 = vsel %vm65, %v618, 0
    %v651 = vsel %vm65, %v619, 0
    %v654 = vsel %vm65, %v620, 0
    %656 = vmatprep.subr.mxu0 0.0
    %657 = vmatpush1.msra.mxu0 0.0
    %658 = vmatprep.subr.mxu0 0.0
    %659 = vmatpush1.msra.mxu0 0.0
    %660 = vmatprep.subr.mxu0 0.0
    %661 = vmatpush1.msra.mxu0 0.0
    %662 = vmatprep.subr.mxu0 0.0
    %663 = vmatpush1.msra.mxu0 0.0
    %664 = vmatprep.subr.mxu0 0.0
    %665 = vmatpush1.msra.mxu0 0.0
    %666 = vmatprep.subr.mxu0 0.0
    %667 = vmatpush1.msra.mxu0 0.0
    %668 = vmatprep.subr.mxu0 0.0
    %669 = vmatpush1.msra.mxu0 0.0
    %670 = vmatprep.subr.mxu0 0.0
    %671 = vmatpush1.msra.mxu0 0.0
    %672 = vmatprep.subr.mxu0 0.0
    %673 = vmatpush1.msra.mxu0 0.0
    %674 = vmatprep.subr.mxu0 0.0
    %675 = vmatpush1.msra.mxu0 0.0
    %676 = vmatprep.subr.mxu0 0.0
    %677 = vmatpush1.msra.mxu0 0.0
    %678 = vmatprep.subr.mxu0 0.0
    %679 = vmatpush1.msra.mxu0 0.0
    %680 = vmatprep.subr.mxu0 0.0
    %681 = vmatpush1.msra.mxu0 %v624
    %682 = vmatprep.subr.mxu0 0.0
    %683 = vmatpush1.msra.mxu0 %v623
    %684 = vmatprep.subr.mxu0 0.0
    %685 = vmatpush1.msra.mxu0 %v622
    %686 = vmatprep.subr.mxu0 0.0
    %687 = vmatpush1.msra.mxu0 %v621
    %688 = vmatprep.subr.mxu0 0.0
    %689 = vmatpush2.msra.mxu0 0.0
    %690 = vmatprep.subr.mxu0 0.0
    %691 = vmatpush2.msra.mxu0 0.0
    %692 = vmatprep.subr.mxu0 0.0
    %693 = vmatpush2.msra.mxu0 0.0
    %694 = vmatprep.subr.mxu0 0.0
    %695 = vmatpush2.msra.mxu0 0.0
    %696 = vmatprep.subr.mxu0 0.0
    %697 = vmatpush2.msra.mxu0 0.0
    %698 = vmatprep.subr.mxu0 0.0
    %699 = vmatpush2.msra.mxu0 0.0
    %700 = vmatprep.subr.mxu0 0.0
    %701 = vmatpush2.msra.mxu0 0.0
    %702 = vmatprep.subr.mxu0 0.0
    %703 = vmatpush2.msra.mxu0 0.0
    %704 = vmatprep.subr.mxu0 0.0
    %705 = vmatpush2.msra.mxu0 0.0
    %706 = vmatprep.subr.mxu0 0.0
    %707 = vmatpush2.msra.mxu0 0.0
    %708 = vmatprep.subr.mxu0 0.0
    %709 = vmatpush2.msra.mxu0 0.0
    %710 = vmatprep.subr.mxu0 0.0
    %711 = vmatpush2.msra.mxu0 0.0
    %712 = vmatprep.subr.mxu0 0.0
    %713 = vmatpush2.msra.mxu0 0.0
    %714 = vmatprep.subr.mxu0 0.0
    %715 = vmatpush2.msra.mxu0 0.0
    %716 = vmatprep.subr.mxu0 0.0
    %717 = vmatpush2.msra.mxu0 0.0
    %718 = vmatprep.subr.mxu0 0.0
    %719 = vmatpush2.msra.mxu0 0.0
    %720 = vmatprep.mubr.f32.mxu0 0.0
    %721 = vmatmul.mubr.f32.gmra.mxu0 %v633
    %v722 = vpop.f32.mrf.mxu0
    %v723 = vadd.f32 %v630, %v722
    %v724 = vpop.f32.mrf.mxu0
    %725 = vmatprep.mubr.f32.mxu0 0.0
    %726 = vmatmul.mubr.f32.gmra.mxu0 %v636
    %v727 = vpop.f32.mrf.mxu0
    %v728 = vadd.f32 %v630, %v727
    %v729 = vpop.f32.mrf.mxu0
    %730 = vmatprep.mubr.f32.mxu0 0.0
    %731 = vmatmul.mubr.f32.gmra.mxu0 %v639
    %v732 = vpop.f32.mrf.mxu0
    %v733 = vadd.f32 %v630, %v732
    %v734 = vpop.f32.mrf.mxu0
    %735 = vmatprep.mubr.f32.mxu0 0.0
    %736 = vmatmul.mubr.f32.gmra.mxu0 %v642
    %v737 = vpop.f32.mrf.mxu0
    %v738 = vadd.f32 %v630, %v737
    %v739 = vpop.f32.mrf.mxu0
    %740 = vmatprep.mubr.f32.mxu0 0.0
    %741 = vmatmul.mubr.f32.gmra.mxu0 %v645
    %v742 = vpop.f32.mrf.mxu0
    %v743 = vadd.f32 %v630, %v742
    %v744 = vpop.f32.mrf.mxu0
    %745 = vmatprep.mubr.f32.mxu0 0.0
    %746 = vmatmul.mubr.f32.gmra.mxu0 %v648
    %v747 = vpop.f32.mrf.mxu0
    %v748 = vadd.f32 %v630, %v747
    %v749 = vpop.f32.mrf.mxu0
    %750 = vmatprep.mubr.f32.mxu0 0.0
    %751 = vmatmul.mubr.f32.gmra.mxu0 %v651
    %v752 = vpop.f32.mrf.mxu0
    %v753 = vadd.f32 %v630, %v752
    %v754 = vpop.f32.mrf.mxu0
    %755 = vmatprep.mubr.f32.mxu0 0.0
    %756 = vmatmul.mubr.f32.gmra.mxu0 %v654
    %v757 = vpop.f32.mrf.mxu0
    %v758 = vadd.f32 %v630, %v757
    %v759 = vpop.f32.mrf.mxu0
    %760 = vdwg.mxu0
    %v762 = vcombine.high %v723, %v723
    %v764 = vunpack.c.l.s4 1966171168
    %v765 = vunpack.c.0.s8 %v764
    %v766 = vlaneseq
    %v767 = vshrl.u32 %v766, 7
    %v768 = vsub.s32 %v765, %v767
    %v769 = vrot.slane %v723, %v768
    %v771 = vunpack.c.l.s4 1966171168
    %v772 = vunpack.c.0.s8 %v771
    %v773 = vlaneseq
    %v774 = vshrl.u32 %v773, 7
    %v775 = vsub.s32 %v772, %v774
    %v776 = vrot.slane %v762, %v775
    %v777 = vcombine.high %v769, %v769
    %v778 = vcombine.high %v776, %v776
    %v780 = vunpack.c.l.s4 1966171168
    %v781 = vunpack.c.0.s8 %v780
    %v782 = vlaneseq
    %v783 = vshrl.u32 %v782, 7
    %v784 = vsub.s32 %v781, %v783
    %v785 = vrot.slane %v769, %v784
    %v787 = vunpack.c.l.s4 1966171168
    %v788 = vunpack.c.0.s8 %v787
    %v789 = vlaneseq
    %v790 = vshrl.u32 %v789, 7
    %v791 = vsub.s32 %v788, %v790
    %v792 = vrot.slane %v776, %v791
    %v794 = vunpack.c.l.s4 1966171168
    %v795 = vunpack.c.0.s8 %v794
    %v796 = vlaneseq
    %v797 = vshrl.u32 %v796, 7
    %v798 = vsub.s32 %v795, %v797
    %v799 = vrot.slane %v777, %v798
    %v801 = vunpack.c.l.s4 1966171168
    %v802 = vunpack.c.0.s8 %v801
    %v803 = vlaneseq
    %v804 = vshrl.u32 %v803, 7
    %v805 = vsub.s32 %v802, %v804
    %v806 = vrot.slane %v778, %v805
    %v807 = vcombine.high %v785, %v785
    %v808 = vcombine.high %v792, %v792
    %v809 = vcombine.high %v799, %v799
    %v810 = vcombine.high %v806, %v806
    %819 = vst [vmem:[#allocation9] sm:$0x1] %v785
    %820 = vst [vmem:[#allocation9 + $0x8] sm:$0x1] %v799
    %821 = vst [vmem:[#allocation9 + $0x10] sm:$0x1] %v807
    %822 = vst [vmem:[#allocation9 + $0x18] sm:$0x1] %v809
    %823 = vst [vmem:[#allocation9 + $0x20] sm:$0x1] %v792
    %824 = vst [vmem:[#allocation9 + $0x28] sm:$0x1] %v806
    %825 = vst [vmem:[#allocation9 + $0x30] sm:$0x1] %v808
    %826 = vst [vmem:[#allocation9 + $0x38] sm:$0x1] %v810
    %v828 = vcombine.high %v728, %v728
    %v830 = vunpack.c.l.s4 1966171168
    %v831 = vunpack.c.0.s8 %v830
    %v832 = vlaneseq
    %v833 = vshrl.u32 %v832, 7
    %v834 = vsub.s32 %v831, %v833
    %v835 = vrot.slane %v728, %v834
    %v837 = vunpack.c.l.s4 1966171168
    %v838 = vunpack.c.0.s8 %v837
    %v839 = vlaneseq
    %v840 = vshrl.u32 %v839, 7
    %v841 = vsub.s32 %v838, %v840
    %v842 = vrot.slane %v828, %v841
    %v843 = vcombine.high %v835, %v835
    %v844 = vcombine.high %v842, %v842
    %v846 = vunpack.c.l.s4 1966171168
    %v847 = vunpack.c.0.s8 %v846
    %v848 = vlaneseq
    %v849 = vshrl.u32 %v848, 7
    %v850 = vsub.s32 %v847, %v849
    %v851 = vrot.slane %v835, %v850
    %v853 = vunpack.c.l.s4 1966171168
    %v854 = vunpack.c.0.s8 %v853
    %v855 = vlaneseq
    %v856 = vshrl.u32 %v855, 7
    %v857 = vsub.s32 %v854, %v856
    %v858 = vrot.slane %v842, %v857
    %v860 = vunpack.c.l.s4 1966171168
    %v861 = vunpack.c.0.s8 %v860
    %v862 = vlaneseq
    %v863 = vshrl.u32 %v862, 7
    %v864 = vsub.s32 %v861, %v863
    %v865 = vrot.slane %v843, %v864
    %v867 = vunpack.c.l.s4 1966171168
    %v868 = vunpack.c.0.s8 %v867
    %v869 = vlaneseq
    %v870 = vshrl.u32 %v869, 7
    %v871 = vsub.s32 %v868, %v870
    %v872 = vrot.slane %v844, %v871
    %v873 = vcombine.high %v851, %v851
    %v874 = vcombine.high %v858, %v858
    %v875 = vcombine.high %v865, %v865
    %v876 = vcombine.high %v872, %v872
    %885 = vst [vmem:[#allocation9 + $0x1] sm:$0x1] %v851
    %886 = vst [vmem:[#allocation9 + $0x9] sm:$0x1] %v865
    %887 = vst [vmem:[#allocation9 + $0x11] sm:$0x1] %v873
    %888 = vst [vmem:[#allocation9 + $0x19] sm:$0x1] %v875
    %889 = vst [vmem:[#allocation9 + $0x21] sm:$0x1] %v858
    %890 = vst [vmem:[#allocation9 + $0x29] sm:$0x1] %v872
    %891 = vst [vmem:[#allocation9 + $0x31] sm:$0x1] %v874
    %892 = vst [vmem:[#allocation9 + $0x39] sm:$0x1] %v876
    %v894 = vcombine.high %v733, %v733
    %v896 = vunpack.c.l.s4 1966171168
    %v897 = vunpack.c.0.s8 %v896
    %v898 = vlaneseq
    %v899 = vshrl.u32 %v898, 7
    %v900 = vsub.s32 %v897, %v899
    %v901 = vrot.slane %v733, %v900
    %v903 = vunpack.c.l.s4 1966171168
    %v904 = vunpack.c.0.s8 %v903
    %v905 = vlaneseq
    %v906 = vshrl.u32 %v905, 7
    %v907 = vsub.s32 %v904, %v906
    %v908 = vrot.slane %v894, %v907
    %v909 = vcombine.high %v901, %v901
    %v910 = vcombine.high %v908, %v908
    %v912 = vunpack.c.l.s4 1966171168
    %v913 = vunpack.c.0.s8 %v912
    %v914 = vlaneseq
    %v915 = vshrl.u32 %v914, 7
    %v916 = vsub.s32 %v913, %v915
    %v917 = vrot.slane %v901, %v916
    %v919 = vunpack.c.l.s4 1966171168
    %v920 = vunpack.c.0.s8 %v919
    %v921 = vlaneseq
    %v922 = vshrl.u32 %v921, 7
    %v923 = vsub.s32 %v920, %v922
    %v924 = vrot.slane %v908, %v923
    %v926 = vunpack.c.l.s4 1966171168
    %v927 = vunpack.c.0.s8 %v926
    %v928 = vlaneseq
    %v929 = vshrl.u32 %v928, 7
    %v930 = vsub.s32 %v927, %v929
    %v931 = vrot.slane %v909, %v930
    %v933 = vunpack.c.l.s4 1966171168
    %v934 = vunpack.c.0.s8 %v933
    %v935 = vlaneseq
    %v936 = vshrl.u32 %v935, 7
    %v937 = vsub.s32 %v934, %v936
    %v938 = vrot.slane %v910, %v937
    %v939 = vcombine.high %v917, %v917
    %v940 = vcombine.high %v924, %v924
    %v941 = vcombine.high %v931, %v931
    %v942 = vcombine.high %v938, %v938
    %951 = vst [vmem:[#allocation9 + $0x2] sm:$0x1] %v917
    %952 = vst [vmem:[#allocation9 + $0xa] sm:$0x1] %v931
    %953 = vst [vmem:[#allocation9 + $0x12] sm:$0x1] %v939
    %954 = vst [vmem:[#allocation9 + $0x1a] sm:$0x1] %v941
    %955 = vst [vmem:[#allocation9 + $0x22] sm:$0x1] %v924
    %956 = vst [vmem:[#allocation9 + $0x2a] sm:$0x1] %v938
    %957 = vst [vmem:[#allocation9 + $0x32] sm:$0x1] %v940
    %958 = vst [vmem:[#allocation9 + $0x3a] sm:$0x1] %v942
    %v960 = vcombine.high %v738, %v738
    %v962 = vunpack.c.l.s4 1966171168
    %v963 = vunpack.c.0.s8 %v962
    %v964 = vlaneseq
    %v965 = vshrl.u32 %v964, 7
    %v966 = vsub.s32 %v963, %v965
    %v967 = vrot.slane %v738, %v966
    %v969 = vunpack.c.l.s4 1966171168
    %v970 = vunpack.c.0.s8 %v969
    %v971 = vlaneseq
    %v972 = vshrl.u32 %v971, 7
    %v973 = vsub.s32 %v970, %v972
    %v974 = vrot.slane %v960, %v973
    %v975 = vcombine.high %v967, %v967
    %v976 = vcombine.high %v974, %v974
    %v978 = vunpack.c.l.s4 1966171168
    %v979 = vunpack.c.0.s8 %v978
    %v980 = vlaneseq
    %v981 = vshrl.u32 %v980, 7
    %v982 = vsub.s32 %v979, %v981
    %v983 = vrot.slane %v967, %v982
    %v985 = vunpack.c.l.s4 1966171168
    %v986 = vunpack.c.0.s8 %v985
    %v987 = vlaneseq
    %v988 = vshrl.u32 %v987, 7
    %v989 = vsub.s32 %v986, %v988
    %v990 = vrot.slane %v974, %v989
    %v992 = vunpack.c.l.s4 1966171168
    %v993 = vunpack.c.0.s8 %v992
    %v994 = vlaneseq
    %v995 = vshrl.u32 %v994, 7
    %v996 = vsub.s32 %v993, %v995
    %v997 = vrot.slane %v975, %v996
    %v999 = vunpack.c.l.s4 1966171168
    %v1000 = vunpack.c.0.s8 %v999
    %v1001 = vlaneseq
    %v1002 = vshrl.u32 %v1001, 7
    %v1003 = vsub.s32 %v1000, %v1002
    %v1004 = vrot.slane %v976, %v1003
    %v1005 = vcombine.high %v983, %v983
    %v1006 = vcombine.high %v990, %v990
    %v1007 = vcombine.high %v997, %v997
    %v1008 = vcombine.high %v1004, %v1004
    %1017 = vst [vmem:[#allocation9 + $0x3] sm:$0x1] %v983
    %1018 = vst [vmem:[#allocation9 + $0xb] sm:$0x1] %v997
    %1019 = vst [vmem:[#allocation9 + $0x13] sm:$0x1] %v1005
    %1020 = vst [vmem:[#allocation9 + $0x1b] sm:$0x1] %v1007
    %1021 = vst [vmem:[#allocation9 + $0x23] sm:$0x1] %v990
    %1022 = vst [vmem:[#allocation9 + $0x2b] sm:$0x1] %v1004
    %1023 = vst [vmem:[#allocation9 + $0x33] sm:$0x1] %v1006
    %1024 = vst [vmem:[#allocation9 + $0x3b] sm:$0x1] %v1008
    %v1026 = vcombine.high %v743, %v743
    %v1028 = vunpack.c.l.s4 1966171168
    %v1029 = vunpack.c.0.s8 %v1028
    %v1030 = vlaneseq
    %v1031 = vshrl.u32 %v1030, 7
    %v1032 = vsub.s32 %v1029, %v1031
    %v1033 = vrot.slane %v743, %v1032
    %v1035 = vunpack.c.l.s4 1966171168
    %v1036 = vunpack.c.0.s8 %v1035
    %v1037 = vlaneseq
    %v1038 = vshrl.u32 %v1037, 7
    %v1039 = vsub.s32 %v1036, %v1038
    %v1040 = vrot.slane %v1026, %v1039
    %v1041 = vcombine.high %v1033, %v1033
    %v1042 = vcombine.high %v1040, %v1040
    %v1044 = vunpack.c.l.s4 1966171168
    %v1045 = vunpack.c.0.s8 %v1044
    %v1046 = vlaneseq
    %v1047 = vshrl.u32 %v1046, 7
    %v1048 = vsub.s32 %v1045, %v1047
    %v1049 = vrot.slane %v1033, %v1048
    %v1051 = vunpack.c.l.s4 1966171168
    %v1052 = vunpack.c.0.s8 %v1051
    %v1053 = vlaneseq
    %v1054 = vshrl.u32 %v1053, 7
    %v1055 = vsub.s32 %v1052, %v1054
    %v1056 = vrot.slane %v1040, %v1055
    %v1058 = vunpack.c.l.s4 1966171168
    %v1059 = vunpack.c.0.s8 %v1058
    %v1060 = vlaneseq
    %v1061 = vshrl.u32 %v1060, 7
    %v1062 = vsub.s32 %v1059, %v1061
    %v1063 = vrot.slane %v1041, %v1062
    %v1065 = vunpack.c.l.s4 1966171168
    %v1066 = vunpack.c.0.s8 %v1065
    %v1067 = vlaneseq
    %v1068 = vshrl.u32 %v1067, 7
    %v1069 = vsub.s32 %v1066, %v1068
    %v1070 = vrot.slane %v1042, %v1069
    %v1071 = vcombine.high %v1049, %v1049
    %v1072 = vcombine.high %v1056, %v1056
    %v1073 = vcombine.high %v1063, %v1063
    %v1074 = vcombine.high %v1070, %v1070
    %1083 = vst [vmem:[#allocation9 + $0x4] sm:$0x1] %v1049
    %1084 = vst [vmem:[#allocation9 + $0xc] sm:$0x1] %v1063
    %1085 = vst [vmem:[#allocation9 + $0x14] sm:$0x1] %v1071
    %1086 = vst [vmem:[#allocation9 + $0x1c] sm:$0x1] %v1073
    %1087 = vst [vmem:[#allocation9 + $0x24] sm:$0x1] %v1056
    %1088 = vst [vmem:[#allocation9 + $0x2c] sm:$0x1] %v1070
    %1089 = vst [vmem:[#allocation9 + $0x34] sm:$0x1] %v1072
    %1090 = vst [vmem:[#allocation9 + $0x3c] sm:$0x1] %v1074
    %v1092 = vcombine.high %v748, %v748
    %v1094 = vunpack.c.l.s4 1966171168
    %v1095 = vunpack.c.0.s8 %v1094
    %v1096 = vlaneseq
    %v1097 = vshrl.u32 %v1096, 7
    %v1098 = vsub.s32 %v1095, %v1097
    %v1099 = vrot.slane %v748, %v1098
    %v1101 = vunpack.c.l.s4 1966171168
    %v1102 = vunpack.c.0.s8 %v1101
    %v1103 = vlaneseq
    %v1104 = vshrl.u32 %v1103, 7
    %v1105 = vsub.s32 %v1102, %v1104
    %v1106 = vrot.slane %v1092, %v1105
    %v1107 = vcombine.high %v1099, %v1099
    %v1108 = vcombine.high %v1106, %v1106
    %v1110 = vunpack.c.l.s4 1966171168
    %v1111 = vunpack.c.0.s8 %v1110
    %v1112 = vlaneseq
    %v1113 = vshrl.u32 %v1112, 7
    %v1114 = vsub.s32 %v1111, %v1113
    %v1115 = vrot.slane %v1099, %v1114
    %v1117 = vunpack.c.l.s4 1966171168
    %v1118 = vunpack.c.0.s8 %v1117
    %v1119 = vlaneseq
    %v1120 = vshrl.u32 %v1119, 7
    %v1121 = vsub.s32 %v1118, %v1120
    %v1122 = vrot.slane %v1106, %v1121
    %v1124 = vunpack.c.l.s4 1966171168
    %v1125 = vunpack.c.0.s8 %v1124
    %v1126 = vlaneseq
    %v1127 = vshrl.u32 %v1126, 7
    %v1128 = vsub.s32 %v1125, %v1127
    %v1129 = vrot.slane %v1107, %v1128
    %v1131 = vunpack.c.l.s4 1966171168
    %v1132 = vunpack.c.0.s8 %v1131
    %v1133 = vlaneseq
    %v1134 = vshrl.u32 %v1133, 7
    %v1135 = vsub.s32 %v1132, %v1134
    %v1136 = vrot.slane %v1108, %v1135
    %v1137 = vcombine.high %v1115, %v1115
    %v1138 = vcombine.high %v1122, %v1122
    %v1139 = vcombine.high %v1129, %v1129
    %v1140 = vcombine.high %v1136, %v1136
    %1149 = vst [vmem:[#allocation9 + $0x5] sm:$0x1] %v1115
    %1150 = vst [vmem:[#allocation9 + $0xd] sm:$0x1] %v1129
    %1151 = vst [vmem:[#allocation9 + $0x15] sm:$0x1] %v1137
    %1152 = vst [vmem:[#allocation9 + $0x1d] sm:$0x1] %v1139
    %1153 = vst [vmem:[#allocation9 + $0x25] sm:$0x1] %v1122
    %1154 = vst [vmem:[#allocation9 + $0x2d] sm:$0x1] %v1136
    %1155 = vst [vmem:[#allocation9 + $0x35] sm:$0x1] %v1138
    %1156 = vst [vmem:[#allocation9 + $0x3d] sm:$0x1] %v1140
    %v1158 = vcombine.high %v753, %v753
    %v1160 = vunpack.c.l.s4 1966171168
    %v1161 = vunpack.c.0.s8 %v1160
    %v1162 = vlaneseq
    %v1163 = vshrl.u32 %v1162, 7
    %v1164 = vsub.s32 %v1161, %v1163
    %v1165 = vrot.slane %v753, %v1164
    %v1167 = vunpack.c.l.s4 1966171168
    %v1168 = vunpack.c.0.s8 %v1167
    %v1169 = vlaneseq
    %v1170 = vshrl.u32 %v1169, 7
    %v1171 = vsub.s32 %v1168, %v1170
    %v1172 = vrot.slane %v1158, %v1171
    %v1173 = vcombine.high %v1165, %v1165
    %v1174 = vcombine.high %v1172, %v1172
    %v1176 = vunpack.c.l.s4 1966171168
    %v1177 = vunpack.c.0.s8 %v1176
    %v1178 = vlaneseq
    %v1179 = vshrl.u32 %v1178, 7
    %v1180 = vsub.s32 %v1177, %v1179
    %v1181 = vrot.slane %v1165, %v1180
    %v1183 = vunpack.c.l.s4 1966171168
    %v1184 = vunpack.c.0.s8 %v1183
    %v1185 = vlaneseq
    %v1186 = vshrl.u32 %v1185, 7
    %v1187 = vsub.s32 %v1184, %v1186
    %v1188 = vrot.slane %v1172, %v1187
    %v1190 = vunpack.c.l.s4 1966171168
    %v1191 = vunpack.c.0.s8 %v1190
    %v1192 = vlaneseq
    %v1193 = vshrl.u32 %v1192, 7
    %v1194 = vsub.s32 %v1191, %v1193
    %v1195 = vrot.slane %v1173, %v1194
    %v1197 = vunpack.c.l.s4 1966171168
    %v1198 = vunpack.c.0.s8 %v1197
    %v1199 = vlaneseq
    %v1200 = vshrl.u32 %v1199, 7
    %v1201 = vsub.s32 %v1198, %v1200
    %v1202 = vrot.slane %v1174, %v1201
    %v1203 = vcombine.high %v1181, %v1181
    %v1204 = vcombine.high %v1188, %v1188
    %v1205 = vcombine.high %v1195, %v1195
    %v1206 = vcombine.high %v1202, %v1202
    %1215 = vst [vmem:[#allocation9 + $0x6] sm:$0x1] %v1181
    %1216 = vst [vmem:[#allocation9 + $0xe] sm:$0x1] %v1195
    %1217 = vst [vmem:[#allocation9 + $0x16] sm:$0x1] %v1203
    %1218 = vst [vmem:[#allocation9 + $0x1e] sm:$0x1] %v1205
    %1219 = vst [vmem:[#allocation9 + $0x26] sm:$0x1] %v1188
    %1220 = vst [vmem:[#allocation9 + $0x2e] sm:$0x1] %v1202
    %1221 = vst [vmem:[#allocation9 + $0x36] sm:$0x1] %v1204
    %1222 = vst [vmem:[#allocation9 + $0x3e] sm:$0x1] %v1206
    %v1224 = vcombine.high %v758, %v758
    %v1226 = vunpack.c.l.s4 1966171168
    %v1227 = vunpack.c.0.s8 %v1226
    %v1228 = vlaneseq
    %v1229 = vshrl.u32 %v1228, 7
    %v1230 = vsub.s32 %v1227, %v1229
    %v1231 = vrot.slane %v758, %v1230
    %v1233 = vunpack.c.l.s4 1966171168
    %v1234 = vunpack.c.0.s8 %v1233
    %v1235 = vlaneseq
    %v1236 = vshrl.u32 %v1235, 7
    %v1237 = vsub.s32 %v1234, %v1236
    %v1238 = vrot.slane %v1224, %v1237
    %v1239 = vcombine.high %v1231, %v1231
    %v1240 = vcombine.high %v1238, %v1238
    %v1242 = vunpack.c.l.s4 1966171168
    %v1243 = vunpack.c.0.s8 %v1242
    %v1244 = vlaneseq
    %v1245 = vshrl.u32 %v1244, 7
    %v1246 = vsub.s32 %v1243, %v1245
    %v1247 = vrot.slane %v1231, %v1246
    %v1249 = vunpack.c.l.s4 1966171168
    %v1250 = vunpack.c.0.s8 %v1249
    %v1251 = vlaneseq
    %v1252 = vshrl.u32 %v1251, 7
    %v1253 = vsub.s32 %v1250, %v1252
    %v1254 = vrot.slane %v1238, %v1253
    %v1256 = vunpack.c.l.s4 1966171168
    %v1257 = vunpack.c.0.s8 %v1256
    %v1258 = vlaneseq
    %v1259 = vshrl.u32 %v1258, 7
    %v1260 = vsub.s32 %v1257, %v1259
    %v1261 = vrot.slane %v1239, %v1260
    %v1263 = vunpack.c.l.s4 1966171168
    %v1264 = vunpack.c.0.s8 %v1263
    %v1265 = vlaneseq
    %v1266 = vshrl.u32 %v1265, 7
    %v1267 = vsub.s32 %v1264, %v1266
    %v1268 = vrot.slane %v1240, %v1267
    %v1269 = vcombine.high %v1247, %v1247
    %v1270 = vcombine.high %v1254, %v1254
    %v1271 = vcombine.high %v1261, %v1261
    %v1272 = vcombine.high %v1268, %v1268
    %1281 = vst [vmem:[#allocation9 + $0x7] sm:$0x1] %v1247
    %1282 = vst [vmem:[#allocation9 + $0xf] sm:$0x1] %v1261
    %1283 = vst [vmem:[#allocation9 + $0x17] sm:$0x1] %v1269
    %1284 = vst [vmem:[#allocation9 + $0x1f] sm:$0x1] %v1271
    %1285 = vst [vmem:[#allocation9 + $0x27] sm:$0x1] %v1254
    %1286 = vst [vmem:[#allocation9 + $0x2f] sm:$0x1] %v1268
    %1287 = vst [vmem:[#allocation9 + $0x37] sm:$0x1] %v1270
    %1288 = vst [vmem:[#allocation9 + $0x3f] sm:$0x1] %v1272
    // Predicated region
    $region30: #{tpu_custom_call.1} parent=1 // pred_check
      _
    $region31: #{tpu_custom_call.1} parent=1 // pred_check_branch
      %1290 = sbr.rel (0) target = $region33
    $region32: #{tpu_custom_call.1} parent=1 // pred_region
      %s1292 = ssub.s32 1024, 1024
      %1293 = vsyncadd [#allocation5], %s1292
      %s1294 = sshll.u32 [#allocation9], 4
      %s1295 = int_to_ptr.vmem [resolvable:$true] %s1294
      %1300 = dma.vmem_to_hbm [thread:$0]  %s1295, 1024, %s4, [#allocation5], 128, 128, 8
    $region33: #{tpu_custom_call.1} parent=1 // pred_fallthru
      _
    // Predicated region
    $region34: #{tpu_custom_call.1} parent=1 // pred_check
      _
    $region35: #{tpu_custom_call.1} parent=1 // pred_check_branch
      %1302 = sbr.rel (0) target = $region37
    $region36: #{tpu_custom_call.1} parent=1 // pred_region
      %1303 = dma.done [#allocation5], 1024
    $region37: #{tpu_custom_call.1} parent=1 // pred_fallthru
      _
    %1304 = vsyncpa [#allocation4], 1
    %1305 = vsyncpa [#allocation7], 1
    %1306 = vsyncpa [#allocation5], 1

</llo_original>
